<compile_context>
chip_gen: v5e
topology: v5e:2x2
jax: 0.10.0
libtpu: 0.0.40
codegen_flags: <defaults>
</compile_context>

<pallas_src>
import functools

import jax
import jax.numpy as jnp
from jax.experimental import pallas as pl
from jax.experimental.pallas import tpu as pltpu


# ---------------------------------------------------------------------------
# Fused kernel: y = actN(... act1(x @ W1 + b1) ... @ WN + bN)
# ---------------------------------------------------------------------------
def _fused_mlp_kernel(x_ref, *refs, activations):
    # refs = (w1, b1, w2, b2, ..., o_ref); weights/biases are full-array VMEM
    # blocks, x/o are one batch tile each.
    o_ref = refs[-1]
    wb_refs = refs[:-1]
    n_layers = len(wb_refs) // 2

    h = x_ref[...].astype(jnp.float32)
    for layer in range(n_layers):
        w = wb_refs[2 * layer][...]
        b = wb_refs[2 * layer + 1][...]
        h = jnp.dot(h, w, preferred_element_type=jnp.float32) + b
        act = activations[layer]
        if act == "relu":
            h = jnp.maximum(h, 0.0)
        elif act == "sigmoid":
            h = jax.nn.sigmoid(h)
        elif act == "identity":
            pass
        else:
            raise ValueError(f"unsupported activation: {act}")
    o_ref[...] = h.astype(o_ref.dtype)


def _const_block(shape):
    # Weights/biases: same full-array block for every grid step -> stays
    # VMEM-resident across batch tiles.
    return pl.BlockSpec(shape, lambda i: (0, 0))


def fused_mlp(x, weights, biases, activations, *, max_batch_tile=512):
    """Run a stack of (Linear + activation) layers in ONE pallas_call."""
    batch, f_in = x.shape
    f_out = weights[-1].shape[1]

    # Pad batch to a full-sublane multiple, then pick a batch tile.
    padded = max(8, -(-batch // 8) * 8)
    tb = min(padded, max_batch_tile)
    padded = -(-padded // tb) * tb          # multiple of tb
    if padded != batch:
        x = jnp.pad(x, ((0, padded - batch), (0, 0)))
    grid = (padded // tb,)

    operands = [x]
    in_specs = [pl.BlockSpec((tb, f_in), lambda i: (i, 0))]
    for w, b in zip(weights, biases):
        fi, fo = w.shape
        operands.append(w)
        operands.append(b.reshape(1, fo))
        in_specs.append(_const_block((fi, fo)))
        in_specs.append(_const_block((1, fo)))

    # Advisory cost hint (matmul flops + sigmoid transcendentals).
    flops = sum(2 * padded * w.shape[0] * w.shape[1] for w in weights)
    transcendentals = sum(
        padded * w.shape[1]
        for w, a in zip(weights, activations) if a == "sigmoid")
    bytes_accessed = 4 * (
        padded * f_in
        + sum(w.size + w.shape[1] for w in weights)
        + padded * f_out)

    kernel = functools.partial(_fused_mlp_kernel,
                               activations=tuple(activations))
    out = pl.pallas_call(
        kernel,
        out_shape=jax.ShapeDtypeStruct((padded, f_out), x.dtype),
        grid=grid,
        in_specs=in_specs,
        out_specs=pl.BlockSpec((tb, f_out), lambda i: (i, 0)),
        compiler_params=pltpu.CompilerParams(
            dimension_semantics=("parallel",)),
        cost_estimate=pl.CostEstimate(
            flops=flops,
            transcendentals=transcendentals,
            bytes_accessed=bytes_accessed),
    )(*operands)
    if padded != batch:
        out = out[:batch]
    return out


# ---------------------------------------------------------------------------
# Standalone elementwise activation (no preceding Linear): pure VPU/EUP kernel
# ---------------------------------------------------------------------------
def _act_kernel(x_ref, o_ref, *, activation):
    h = x_ref[...]
    if activation == "relu":
        h = jnp.maximum(h, 0.0)
    elif activation == "sigmoid":
        h = jax.nn.sigmoid(h)
    elif activation == "identity":
        pass
    else:
        raise ValueError(f"unsupported activation: {activation}")
    o_ref[...] = h.astype(o_ref.dtype)


def elementwise_act(x, activation):
    batch, f = x.shape
    padded = max(8, -(-batch // 8) * 8)
    if padded != batch:
        x = jnp.pad(x, ((0, padded - batch), (0, 0)))
    out = pl.pallas_call(
        functools.partial(_act_kernel, activation=activation),
        out_shape=jax.ShapeDtypeStruct((padded, f), x.dtype),
        in_specs=[pl.BlockSpec((padded, f), lambda: (0, 0))],
        out_specs=pl.BlockSpec((padded, f), lambda: (0, 0)),
    )(x)
    if padded != batch:
        out = out[:batch]
    return out


# ---------------------------------------------------------------------------
# MLP: mirrors MLP(nn_config) with a concrete config
# ---------------------------------------------------------------------------
# nn_config equivalent:
#   [{'name': 'linear',  'kwargs': {'in_features': 32, 'out_features': 64}},
#    {'name': 'relu'},
#    {'name': 'linear',  'kwargs': {'in_features': 64, 'out_features': 16}},
#    {'name': 'sigmoid'}]
MLP_CONFIG = [
    ("linear", 32, 64),
    ("relu",),
    ("linear", 64, 16),
    ("sigmoid",),
]


def init_mlp_params(key, config):
    """Deterministic parameter init (PyTorch nn.Linear-style uniform bounds)."""
    params = []
    for layer in config:
        if layer[0] == "linear":
            _, f_in, f_out = layer
            key, kw, kb = jax.random.split(key, 3)
            bound = 1.0 / jnp.sqrt(f_in)
            # PyTorch stores weight as [out, in]; we keep [in, out] for the kernel.
            w = jax.random.uniform(kw, (f_in, f_out), jnp.float32, -bound, bound)
            bias = jax.random.uniform(kb, (f_out,), jnp.float32, -bound, bound)
            params.append((w, bias))
        else:
            params.append(None)
    return params


def mlp_forward(x, params, config):
    """Sequential forward.  Consecutive Linear(+activation) layers are fused
    into a SINGLE pallas_call; a standalone activation runs as an elementwise
    Pallas kernel."""
    i = 0
    n = len(config)
    pend_w, pend_b, pend_act = [], [], []

    def flush(x):
        if pend_w:
            x = fused_mlp(x, list(pend_w), list(pend_b), list(pend_act))
            pend_w.clear()
            pend_b.clear()
            pend_act.clear()
        return x

    while i < n:
        layer = config[i]
        if layer[0] == "linear":
            w, b = params[i]
            act = "identity"
            if i + 1 < n and config[i + 1][0] in ("relu", "sigmoid", "identity"):
                act = config[i + 1][0]
                i += 1
            pend_w.append(w)
            pend_b.append(b)
            pend_act.append(act)
        elif layer[0] in ("relu", "sigmoid", "identity"):
            x = flush(x)
            x = elementwise_act(x, layer[0])
        else:
            # TODO(synk): other layer types (conv/lstm/pool/...) from the
            # `functions` table are not part of this MLP config and are not
            # implemented here.
            raise NotImplementedError(layer[0])
        i += 1
    return flush(x)


if __name__ == "__main__":
    key = jax.random.PRNGKey(0)
    key, kx = jax.random.split(key)

    batch, in_features = 2, 32
    x = jax.random.normal(kx, (batch, in_features), jnp.float32)

    params = init_mlp_params(key, MLP_CONFIG)
    out = mlp_forward(x, params, MLP_CONFIG)
    out = jax.block_until_ready(out)

    # sanity check against a pure-JAX reference
    ref = x
    for layer, p in zip(MLP_CONFIG, params):
        if layer[0] == "linear":
            w, b = p
            ref = ref @ w + b
        elif layer[0] == "relu":
            ref = jnp.maximum(ref, 0.0)
        elif layer[0] == "sigmoid":
            ref = jax.nn.sigmoid(ref)
    assert out.shape == (batch, 16)
    assert jnp.allclose(out, ref, atol=1e-5, rtol=1e-5)

    print("KERNEL_OK")
</pallas_src>

<mosaic_0001>
module attributes {stable_mosaic.version = 11 : i64} {
  func.func @_fused_mlp_kernel(%arg0: i32, %arg1: memref<8x32xf32, #tpu.memory_space<vmem>>, %arg2: memref<32x64xf32, #tpu.memory_space<vmem>>, %arg3: memref<1x64xf32, #tpu.memory_space<vmem>>, %arg4: memref<64x16xf32, #tpu.memory_space<vmem>>, %arg5: memref<1x16xf32, #tpu.memory_space<vmem>>, %arg6: memref<8x16xf32, #tpu.memory_space<vmem>>) attributes {dimension_semantics = [#tpu.dimension_semantics<parallel>], iteration_bounds = array<i64: 1>, scalar_prefetch = 0 : i64, scratch_operands = 0 : i64, tpu.core_type = #tpu.core_type<tc>, window_params = [{transform_indices = @transform_0, window_bounds = array<i64: 8, 32>}, {pipeline_mode = #tpu.pipeline_mode<synchronous>, transform_indices = @transform_1, window_bounds = array<i64: 32, 64>}, {pipeline_mode = #tpu.pipeline_mode<synchronous>, transform_indices = @transform_2, window_bounds = array<i64: 1, 64>}, {pipeline_mode = #tpu.pipeline_mode<synchronous>, transform_indices = @transform_3, window_bounds = array<i64: 64, 16>}, {pipeline_mode = #tpu.pipeline_mode<synchronous>, transform_indices = @transform_4, window_bounds = array<i64: 1, 16>}, {transform_indices = @transform_5, window_bounds = array<i64: 8, 16>}]} {
    %c0 = arith.constant 0 : index
    %c0_0 = arith.constant 0 : index
    %0 = vector.load %arg1[%c0, %c0_0] : memref<8x32xf32, #tpu.memory_space<vmem>>, vector<8x32xf32>
    %c0_1 = arith.constant 0 : index
    %c0_2 = arith.constant 0 : index
    %1 = vector.load %arg2[%c0_1, %c0_2] : memref<32x64xf32, #tpu.memory_space<vmem>>, vector<32x64xf32>
    %c0_3 = arith.constant 0 : index
    %c0_4 = arith.constant 0 : index
    %2 = vector.load %arg3[%c0_3, %c0_4] : memref<1x64xf32, #tpu.memory_space<vmem>>, vector<1x64xf32>
    %cst = arith.constant dense<0.000000e+00> : vector<8x64xf32>
    %3 = tpu.matmul %0, %1, %cst {dimension_numbers = #tpu.dot_dimension_numbers<[1], [0], [0], [1], [0, 0, 1, 1], [], []>} : vector<8x32xf32>, vector<32x64xf32>, vector<8x64xf32> -> vector<8x64xf32>
    %4 = vector.broadcast %2 : vector<1x64xf32> to vector<8x64xf32>
    %5 = arith.addf %3, %4 : vector<8x64xf32>
    %cst_5 = arith.constant 0.000000e+00 : f32
    %6 = vector.broadcast %cst_5 : f32 to vector<8x64xf32>
    %7 = arith.maximumf %5, %6 : vector<8x64xf32>
    %c0_6 = arith.constant 0 : index
    %c0_7 = arith.constant 0 : index
    %8 = vector.load %arg4[%c0_6, %c0_7] : memref<64x16xf32, #tpu.memory_space<vmem>>, vector<64x16xf32>
    %c0_8 = arith.constant 0 : index
    %c0_9 = arith.constant 0 : index
    %9 = vector.load %arg5[%c0_8, %c0_9] : memref<1x16xf32, #tpu.memory_space<vmem>>, vector<1x16xf32>
    %cst_10 = arith.constant dense<0.000000e+00> : vector<8x16xf32>
    %10 = tpu.matmul %7, %8, %cst_10 {dimension_numbers = #tpu.dot_dimension_numbers<[1], [0], [0], [1], [0, 0, 1, 1], [], []>} : vector<8x64xf32>, vector<64x16xf32>, vector<8x16xf32> -> vector<8x16xf32>
    %11 = vector.broadcast %9 : vector<1x16xf32> to vector<8x16xf32>
    %12 = arith.addf %10, %11 : vector<8x16xf32>
    %13 = arith.negf %12 : vector<8x16xf32>
    %14 = math.exp %13 : vector<8x16xf32>
    %cst_11 = arith.constant 1.000000e+00 : f32
    %15 = vector.broadcast %cst_11 : f32 to vector<8x16xf32>
    %16 = arith.addf %15, %14 : vector<8x16xf32>
    %17 = arith.divf %15, %16 : vector<8x16xf32>
    %c0_12 = arith.constant 0 : index
    %c0_13 = arith.constant 0 : index
    %18 = vector.load %arg6[%c0_12, %c0_13] : memref<8x16xf32, #tpu.memory_space<vmem>>, vector<8x16xf32>
    tpu.vector_store %arg6[%c0_12, %c0_13], %17 {strides = array<i32>} : memref<8x16xf32, #tpu.memory_space<vmem>>, vector<8x16xf32>,
    return
  }
  func.func @transform_0(%arg0: i32) -> (i32, i32) {
    %c0_i32 = arith.constant 0 : i32
    %c0_i32_0 = arith.constant 0 : i32
    return %arg0, %c0_i32 : i32, i32
  }
  func.func @transform_1(%arg0: i32) -> (i32, i32) {
    %c0_i32 = arith.constant 0 : i32
    %c0_i32_0 = arith.constant 0 : i32
    %c0_i32_1 = arith.constant 0 : i32
    return %c0_i32, %c0_i32_0 : i32, i32
  }
  func.func @transform_2(%arg0: i32) -> (i32, i32) {
    %c0_i32 = arith.constant 0 : i32
    %c0_i32_0 = arith.constant 0 : i32
    %c0_i32_1 = arith.constant 0 : i32
    return %c0_i32, %c0_i32_0 : i32, i32
  }
  func.func @transform_3(%arg0: i32) -> (i32, i32) {
    %c0_i32 = arith.constant 0 : i32
    %c0_i32_0 = arith.constant 0 : i32
    %c0_i32_1 = arith.constant 0 : i32
    return %c0_i32, %c0_i32_0 : i32, i32
  }
  func.func @transform_4(%arg0: i32) -> (i32, i32) {
    %c0_i32 = arith.constant 0 : i32
    %c0_i32_0 = arith.constant 0 : i32
    %c0_i32_1 = arith.constant 0 : i32
    return %c0_i32, %c0_i32_0 : i32, i32
  }
  func.func @transform_5(%arg0: i32) -> (i32, i32) {
    %c0_i32 = arith.constant 0 : i32
    %c0_i32_0 = arith.constant 0 : i32
    return %arg0, %c0_i32 : i32, i32
  }
}

</mosaic_0001>

<llo_original>
// kernel: tpu_custom_call.1
$region0: #{tpu_custom_call.1}
  #allocation0 [shape = 'u32[]', space=smem, size = 0x4, offset = 0x4, fixed_abs, tag = 'smem constant byte address 0x4 - core index']
  #allocation1 [shape = 'u32[72,128]{1,0:T(1,128)}', space=vmem, size = 0x9000, scoped, tag = 'internal scratch']
  %s0 = inlined_call_operand.vmem [shape: f32[8,32], index: 0, kind: input, shape index: {}]
  %s1 = inlined_call_operand.vmem [shape: f32[32,64], index: 1, kind: input, shape index: {}]
  %s2 = inlined_call_operand.vmem [shape: f32[1,64], index: 2, kind: input, shape index: {}]
  %s3 = inlined_call_operand.vmem [shape: f32[64,16], index: 3, kind: input, shape index: {}]
  %s4 = inlined_call_operand.vmem [shape: f32[1,16], index: 4, kind: input, shape index: {}]
  %s5 = inlined_call_operand.hbm [shape: f32[8,16], index: 5, kind: output, shape index: {}]
  %s6 = sld [smem:[#allocation0]]
  $region30: #{tpu_custom_call.1} parent=0
    _
  %s8 = ssub.s32 1, %s6
  %s9 = scalar_select 0, %s8, %s6
  $region1: #{tpu_custom_call.1} parent=0
    #allocation2 [shape = 'u8[4096]{0}', space=vmem, size = 0x1000, scoped, tag = 'output window, operand 0, single buffered']
    #allocation3 [shape = 's32[1]{0}', space=sflag, size = 0x4, scoped, tag = 'scoped memory for tpu_custom_call.1']
    %10 = vsyncpa [#allocation3], 0
    // Predicated region
    $region2: #{tpu_custom_call.1} parent=1 // pred_check
      _
    $region3: #{tpu_custom_call.1} parent=1 // pred_check_branch
      %12 = sbr.rel (0) target = $region5
    $region4: #{tpu_custom_call.1} parent=1 // pred_region
      _
    $region5: #{tpu_custom_call.1} parent=1 // pred_fallthru
      _
    // Predicated region
    $region6: #{tpu_custom_call.1} parent=1 // pred_check
      _
    $region7: #{tpu_custom_call.1} parent=1 // pred_check_branch
      %14 = sbr.rel (0) target = $region9
    $region8: #{tpu_custom_call.1} parent=1 // pred_region
      _
    $region9: #{tpu_custom_call.1} parent=1 // pred_fallthru
      _
    // Predicated region
    $region10: #{tpu_custom_call.1} parent=1 // pred_check
      _
    $region11: #{tpu_custom_call.1} parent=1 // pred_check_branch
      %16 = sbr.rel (0) target = $region13
    $region12: #{tpu_custom_call.1} parent=1 // pred_region
      _
    $region13: #{tpu_custom_call.1} parent=1 // pred_fallthru
      _
    // Predicated region
    $region14: #{tpu_custom_call.1} parent=1 // pred_check
      _
    $region15: #{tpu_custom_call.1} parent=1 // pred_check_branch
      %18 = sbr.rel (0) target = $region17
    $region16: #{tpu_custom_call.1} parent=1 // pred_region
      _
    $region17: #{tpu_custom_call.1} parent=1 // pred_fallthru
      _
    // Predicated region
    $region18: #{tpu_custom_call.1} parent=1 // pred_check
      _
    $region19: #{tpu_custom_call.1} parent=1 // pred_check_branch
      %20 = sbr.rel (0) target = $region21
    $region20: #{tpu_custom_call.1} parent=1 // pred_region
      _
    $region21: #{tpu_custom_call.1} parent=1 // pred_fallthru
      _
    %v21 = vld [vmem:[%s0] sm:$0xff]
    %v22 = vld [vmem:[%s1] sm:$0xff]
    %v23 = vld [vmem:[%s1 + $0x8] sm:$0xff]
    %v24 = vld [vmem:[%s1 + $0x10] sm:$0xff]
    %v25 = vld [vmem:[%s1 + $0x18] sm:$0xff]
    %v26 = vld [vmem:[%s2] sm:$0x1]
    %v28 = vperm.slane %v26, 0
    %vm30 = vcmask 261120
    %v32 = vsel %vm30, %v21, 0
    %34 = vmatpush.msra.mxu0 0.0
    %35 = vmatpush.msra.mxu0 0.0
    %36 = vmatpush.msra.mxu0 0.0
    %37 = vmatpush.msra.mxu0 0.0
    %38 = vmatpush.msra.mxu0 0.0
    %39 = vmatpush.msra.mxu0 0.0
    %40 = vmatpush.msra.mxu0 0.0
    %41 = vmatpush.msra.mxu0 0.0
    %42 = vmatpush.msra.mxu0 0.0
    %43 = vmatpush.msra.mxu0 0.0
    %44 = vmatpush.msra.mxu0 0.0
    %45 = vmatpush.msra.mxu0 0.0
    %46 = vmatpush.msra.mxu0 %v25
    %47 = vmatpush.msra.mxu0 %v24
    %48 = vmatpush.msra.mxu0 %v23
    %49 = vmatpush.msra.mxu0 %v22
    %50 = vmatmul.f32.gmra.mxu0 %v32
    %v51 = vpop.f32.mrf.mxu0
    %v52 = vadd.f32 %v28, %v51
    %53 = vdwg.mxu0
    %v54 = vmax.f32 %v52, 0.0
    %v55 = vld [vmem:[%s3] sm:$0xff]
    %v56 = vld [vmem:[%s3 + $0x8] sm:$0xff]
    %v57 = vld [vmem:[%s3 + $0x10] sm:$0xff]
    %v58 = vld [vmem:[%s3 + $0x18] sm:$0xff]
    %v59 = vld [vmem:[%s3 + $0x20] sm:$0xff]
    %v60 = vld [vmem:[%s3 + $0x28] sm:$0xff]
    %v61 = vld [vmem:[%s3 + $0x30] sm:$0xff]
    %v62 = vld [vmem:[%s3 + $0x38] sm:$0xff]
    %v63 = vld [vmem:[%s4] sm:$0x1]
    %v65 = vperm.slane %v63, 0
    %vm67 = vcmask 523264
    %v69 = vsel %vm67, %v54, 0
    %71 = vmatpush.msra.mxu0 0.0
    %72 = vmatpush.msra.mxu0 0.0
    %73 = vmatpush.msra.mxu0 0.0
    %74 = vmatpush.msra.mxu0 0.0
    %75 = vmatpush.msra.mxu0 0.0
    %76 = vmatpush.msra.mxu0 0.0
    %77 = vmatpush.msra.mxu0 0.0
    %78 = vmatpush.msra.mxu0 0.0
    %79 = vmatpush.msra.mxu0 %v62
    %80 = vmatpush.msra.mxu0 %v61
    %81 = vmatpush.msra.mxu0 %v60
    %82 = vmatpush.msra.mxu0 %v59
    %83 = vmatpush.msra.mxu0 %v58
    %84 = vmatpush.msra.mxu0 %v57
    %85 = vmatpush.msra.mxu0 %v56
    %86 = vmatpush.msra.mxu0 %v55
    %87 = vmatmul.f32.gmra.mxu0 %v69
    %v88 = vpop.f32.mrf.mxu0
    %v89 = vadd.f32 %v65, %v88
    %90 = vdwg.mxu0
    %v91 = vxor.u32 %v89, 2147483648
    %v92 = vmul.f32 %v91, 1.442695
    %v93 = vpow.pop %v92
    %v94 = vadd.f32 %v93, 1.0
    %v95 = vrcp.pop %v94
    %v96 = vmul.f32 %v94, %v95
    %v97 = vsub.f32 1.0, %v96
    %v98 = vmul.f32 %v95, %v97
    %v99 = vadd.f32 %v95, %v98
    %vm100 = vweird.f32 %v94
    %vm101 = vweird.f32 %v95
    %vm102 = vmor %vm100, %vm101
    %v103 = vsel %vm102, %v95, %v99
    %v104 = vand.u32 2147483647, %v94
    %vm105 = vcmp.eq.f32.partialorder %v104, 8.507059e+37
    %v106 = vand.u32 %v94, 2147483648
    %v107 = vor.u32 1.1754944e-38, %v106
    %v108 = vsel %vm105, %v107, %v103
    %v109 = vmul.f32 1.0, %v108
    %vm110 = vcmask 130048
    %111 = vst.msk [vmem:[#allocation2] sm:$0xff] %vm110, %v109
    // Predicated region
    $region22: #{tpu_custom_call.1} parent=1 // pred_check
      _
    $region23: #{tpu_custom_call.1} parent=1 // pred_check_branch
      %113 = sbr.rel (0) target = $region25
    $region24: #{tpu_custom_call.1} parent=1 // pred_region
      %115 = vsyncadd [#allocation3], 0
      %s117 = sshll.u32 [#allocation2], 4
      %s118 = int_to_ptr.vmem [resolvable:$true] %s117
      %s119 = sshll.u32 %s5, 4
      %s120 = int_to_ptr.hbm [resolvable:$true] %s119
      %122 = dma.vmem_to_hbm [thread:$0]  %s118, 128, %s120, [#allocation3]
    $region25: #{tpu_custom_call.1} parent=1 // pred_fallthru
      _
    // Predicated region
    $region26: #{tpu_custom_call.1} parent=1 // pred_check
      _
    $region27: #{tpu_custom_call.1} parent=1 // pred_check_branch
      %124 = sbr.rel (0) target = $region29
    $region28: #{tpu_custom_call.1} parent=1 // pred_region
      %126 = dma.done [#allocation3], 128
    $region29: #{tpu_custom_call.1} parent=1 // pred_fallthru
      _
    %127 = vsyncpa [#allocation3], 1

</llo_original>
